<compile_context>
chip_gen: v6e
topology: v6e:2x2x1
jax: 0.10.0
libtpu: 0.0.40
codegen_flags: <defaults>
</compile_context>

<pallas_src>
import functools

import jax
import jax.numpy as jnp
from jax.experimental import pallas as pl
from jax.experimental.pallas import tpu as pltpu


C_IN = 256
C_MID = 16
C_OUT = 2


def _round_up(x, m):
    return ((x + m - 1) // m) * m


def netc2_kernel(x_ref, wc_ref, bc_ref, we_ref, be_ref, wm_ref, wf_ref, bf_ref,
                 mask_ref, out_ref, acc_ref, *, inv_hw):
    """x_ref: (TB, THW, 256) chunk; acc_ref: (TB, 256) f32 pooled-sum scratch."""
    k = pl.program_id(1)

    @pl.when(k == 0)
    def _init():
        acc_ref[...] = jnp.zeros_like(acc_ref)

    # Partial spatial sum for this chunk.  Channels stay in the lane dim, so
    # this is a plain sublane add; accumulate in f32 regardless of x dtype.
    acc_ref[...] += jnp.sum(x_ref[...].astype(jnp.float32), axis=1)

    @pl.when(k == pl.num_programs(1) - 1)
    def _finalize():
        pooled = acc_ref[...] * inv_hw                                    # (TB, 256)

        # compress: 1x1 conv 256->16 (+bias), relu
        h = jnp.dot(pooled, wc_ref[...],
                    preferred_element_type=jnp.float32) + bc_ref[...]     # (TB, 16)
        h = jnp.maximum(h, 0.0)

        # excitation: 1x1 conv 16->256 (+bias)
        e = jnp.dot(h, we_ref[...],
                    preferred_element_type=jnp.float32) + be_ref[...]     # (TB, 256)

        # conv1: 1x1 conv 256->256 (no bias), sigmoid -> mask
        mask_ref[...] = jax.nn.sigmoid(
            jnp.dot(e, wm_ref[...], preferred_element_type=jnp.float32))  # (TB, 256)

        # fc: Linear(256 -> 2)
        out_ref[...] = jnp.dot(e, wf_ref[...],
                               preferred_element_type=jnp.float32) + bf_ref[...]  # (TB, 2)


def netc2_forward(x, params, *, x_dtype=None, target_buf_bytes=4 << 20):
    """x: (b, 256, H, W) float32 NCHW. Returns (mask (b,256,1,1), out (b,2)).

    x_dtype: optionally cast the streamed x tensor (e.g. jnp.bfloat16) to halve
    HBM traffic; pooling still accumulates in f32 inside the kernel.
    """
    b, c, H, W = x.shape
    assert c == C_IN, "netC2 expects 256 input channels"
    hw = H * W

    # Channels-last flat layout: (b, HW, 256) -> lane-dense channels.
    x_flat = jnp.transpose(x.reshape(b, c, hw), (0, 2, 1))
    if x_dtype is not None:
        x_flat = x_flat.astype(x_dtype)
    dtype_size = jnp.dtype(x_flat.dtype).itemsize

    # ---- tile sizing (keep each double-buffered x tile ~target_buf_bytes) ----
    if b <= 8:
        tb = b                                   # block == full batch dim is legal
    else:
        tb = min(_round_up(b, 8), 64)            # multiple of 8 for output blocks
    b_pad = _round_up(b, tb)

    max_thw = max(8, (target_buf_bytes // (tb * C_IN * dtype_size)) // 8 * 8)
    thw = min(_round_up(hw, 8), max_thw)
    hw_pad = _round_up(hw, thw)

    if (b_pad, hw_pad) != (b, hw):
        # zero padding is exact for the pooled *sum*; scale uses the true HW.
        x_flat = jnp.pad(x_flat, ((0, b_pad - b), (0, hw_pad - hw), (0, 0)))

    grid = (b_pad // tb, hw_pad // thw)
    inv_hw = 1.0 / float(hw)

    # ---- parameters pre-transposed to (in_dim, out_dim), biases as rows ----
    wc = params["compress_w"].reshape(C_MID, C_IN).T          # (256, 16)
    bc = params["compress_b"].reshape(1, C_MID)
    we = params["excitation_w"].reshape(C_IN, C_MID).T        # (16, 256)
    be = params["excitation_b"].reshape(1, C_IN)
    wm = params["conv1_w"].reshape(C_IN, C_IN).T              # (256, 256)
    wf = params["fc_w"].T                                     # (256, 2)
    bf = params["fc_b"].reshape(1, C_OUT)

    const_map = lambda i, k: (0, 0)                           # resident weights
    in_specs = [
        pl.BlockSpec((tb, thw, C_IN), lambda i, k: (i, k, 0)),   # streamed x
        pl.BlockSpec((C_IN, C_MID), const_map),
        pl.BlockSpec((1, C_MID), const_map),
        pl.BlockSpec((C_MID, C_IN), const_map),
        pl.BlockSpec((1, C_IN), const_map),
        pl.BlockSpec((C_IN, C_IN), const_map),
        pl.BlockSpec((C_IN, C_OUT), const_map),
        pl.BlockSpec((1, C_OUT), const_map),
    ]
    out_specs = (
        pl.BlockSpec((tb, C_IN), lambda i, k: (i, 0)),
        pl.BlockSpec((tb, C_OUT), lambda i, k: (i, 0)),
    )

    weight_bytes = sum(int(w.size) * 4 for w in (wc, bc, we, be, wm, wf, bf))
    cost = pl.CostEstimate(
        flops=2 * b * hw * C_IN
        + 2 * b * (C_IN * C_MID + C_MID * C_IN + C_IN * C_IN + C_IN * C_OUT),
        transcendentals=b * C_IN,                       # sigmoid
        bytes_accessed=int(x_flat.size) * dtype_size + weight_bytes
        + b * (C_IN + C_OUT) * 4,
    )

    x_buf_bytes = tb * thw * C_IN * dtype_size
    vmem_limit = int(min(2 * x_buf_bytes + (8 << 20), 32 << 20))

    mask_pad, out_pad = pl.pallas_call(
        functools.partial(netc2_kernel, inv_hw=inv_hw),
        out_shape=(
            jax.ShapeDtypeStruct((b_pad, C_IN), jnp.float32),    # mask (flat)
            jax.ShapeDtypeStruct((b_pad, C_OUT), jnp.float32),   # fc output
        ),
        grid_spec=pltpu.PrefetchScalarGridSpec(
            num_scalar_prefetch=0,
            grid=grid,
            in_specs=in_specs,
            out_specs=out_specs,
            scratch_shapes=[pltpu.VMEM((tb, C_IN), jnp.float32)],
        ),
        compiler_params=pltpu.CompilerParams(
            dimension_semantics=("parallel", "arbitrary"),
            vmem_limit_bytes=vmem_limit,
        ),
        cost_estimate=cost,
    )(x_flat, wc, bc, we, be, wm, wf, bf)

    mask = mask_pad[:b].reshape(b, C_IN, 1, 1)
    out = out_pad[:b]
    return mask, out


def init_params(key):
    ks = jax.random.split(key, 7)
    return {
        "compress_w":   jax.random.normal(ks[0], (16, 256, 1, 1), jnp.float32) * 0.05,
        "compress_b":   jax.random.normal(ks[1], (16,), jnp.float32) * 0.01,
        "excitation_w": jax.random.normal(ks[2], (256, 16, 1, 1), jnp.float32) * 0.05,
        "excitation_b": jax.random.normal(ks[3], (256,), jnp.float32) * 0.01,
        "conv1_w":      jax.random.normal(ks[4], (256, 256, 1, 1), jnp.float32) * 0.05,
        "fc_w":         jax.random.normal(ks[5], (2, 256), jnp.float32) * 0.05,
        "fc_b":         jax.random.normal(ks[6], (2,), jnp.float32) * 0.01,
    }


def reference_forward(x, params):
    """Pure-JAX reference mirroring the PyTorch forward exactly."""
    b, c, H, W = x.shape
    pooled = jnp.mean(x, axis=(2, 3))                                  # (b, 256)
    h = pooled @ params["compress_w"].reshape(16, 256).T + params["compress_b"]
    h = jnp.maximum(h, 0.0)
    e = h @ params["excitation_w"].reshape(256, 16).T + params["excitation_b"]
    mask = jax.nn.sigmoid(e @ params["conv1_w"].reshape(256, 256).T).reshape(b, 256, 1, 1)
    out = e @ params["fc_w"].T + params["fc_b"]
    return mask, out


if __name__ == "__main__":
    key = jax.random.PRNGKey(0)
    k_x, k_p = jax.random.split(key)

    b, c, H, W = 2, 256, 16, 16          # channels fixed at 256 by the module
    x = jax.random.normal(k_x, (b, c, H, W), jnp.float32)
    params = init_params(k_p)

    mask_ref, out_ref = reference_forward(x, params)

    # f32 streamed path — exact tolerance.
    mask, out = netc2_forward(x, params)
    jax.block_until_ready((mask, out))
    assert mask.shape == (b, 256, 1, 1) and out.shape == (b, 2)
    assert jnp.allclose(mask, mask_ref, atol=1e-5, rtol=1e-5)
    assert jnp.allclose(out, out_ref, atol=1e-5, rtol=1e-5)

    # bf16 streamed path (halves HBM bytes; f32 accumulation) — loose tolerance.
    mask_bf, out_bf = netc2_forward(x, params, x_dtype=jnp.bfloat16)
    jax.block_until_ready((mask_bf, out_bf))
    assert jnp.allclose(mask_bf, mask_ref, atol=2e-2, rtol=2e-2)
    assert jnp.allclose(out_bf, out_ref, atol=2e-2, rtol=2e-2)

    print("KERNEL_OK")
</pallas_src>

<mosaic_0001>
module attributes {stable_mosaic.version = 11 : i64} {
  func.func @netc2_kernel(%arg0: i32, %arg1: i32, %arg2: memref<2x256x256xf32, #tpu.memory_space<vmem>>, %arg3: memref<256x16xf32, #tpu.memory_space<vmem>>, %arg4: memref<1x16xf32, #tpu.memory_space<vmem>>, %arg5: memref<16x256xf32, #tpu.memory_space<vmem>>, %arg6: memref<1x256xf32, #tpu.memory_space<vmem>>, %arg7: memref<256x256xf32, #tpu.memory_space<vmem>>, %arg8: memref<256x2xf32, #tpu.memory_space<vmem>>, %arg9: memref<1x2xf32, #tpu.memory_space<vmem>>, %arg10: memref<2x256xf32, #tpu.memory_space<vmem>>, %arg11: memref<2x2xf32, #tpu.memory_space<vmem>>, %arg12: memref<2x256xf32, #tpu.memory_space<vmem>>) attributes {dimension_semantics = [#tpu.dimension_semantics<parallel>, #tpu.dimension_semantics<arbitrary>], iteration_bounds = array<i64: 1, 1>, scalar_prefetch = 0 : i64, scratch_operands = 1 : i64, tpu.core_type = #tpu.core_type<tc>, window_params = [{transform_indices = @transform_0, window_bounds = array<i64: 2, 256, 256>}, {pipeline_mode = #tpu.pipeline_mode<synchronous>, transform_indices = @transform_1, window_bounds = array<i64: 256, 16>}, {pipeline_mode = #tpu.pipeline_mode<synchronous>, transform_indices = @transform_2, window_bounds = array<i64: 1, 16>}, {pipeline_mode = #tpu.pipeline_mode<synchronous>, transform_indices = @transform_3, window_bounds = array<i64: 16, 256>}, {pipeline_mode = #tpu.pipeline_mode<synchronous>, transform_indices = @transform_4, window_bounds = array<i64: 1, 256>}, {pipeline_mode = #tpu.pipeline_mode<synchronous>, transform_indices = @transform_5, window_bounds = array<i64: 256, 256>}, {pipeline_mode = #tpu.pipeline_mode<synchronous>, transform_indices = @transform_6, window_bounds = array<i64: 256, 2>}, {pipeline_mode = #tpu.pipeline_mode<synchronous>, transform_indices = @transform_7, window_bounds = array<i64: 1, 2>}, {transform_indices = @transform_8, window_bounds = array<i64: 2, 256>}, {transform_indices = @transform_9, window_bounds = array<i64: 2, 2>}]} {
    %c0_i32 = arith.constant 0 : i32
    %0 = arith.cmpi eq, %arg1, %c0_i32 : i32
    %1 = arith.extui %0 : i1 to i32
    %c0_i32_0 = arith.constant 0 : i32
    %2 = arith.cmpi ne, %1, %c0_i32_0 : i32
    scf.if %2 {
      %cst_9 = arith.constant 0.000000e+00 : f32
      %11 = vector.broadcast %cst_9 : f32 to vector<2x256xf32>
      %c0_10 = arith.constant 0 : index
      %c0_11 = arith.constant 0 : index
      %12 = vector.load %arg12[%c0_10, %c0_11] : memref<2x256xf32, #tpu.memory_space<vmem>>, vector<2x256xf32>
      tpu.vector_store %arg12[%c0_10, %c0_11], %11 {strides = array<i32>} : memref<2x256xf32, #tpu.memory_space<vmem>>, vector<2x256xf32>,
    } else {
    }
    %c0 = arith.constant 0 : index
    %c0_1 = arith.constant 0 : index
    %3 = vector.load %arg12[%c0, %c0_1] : memref<2x256xf32, #tpu.memory_space<vmem>>, vector<2x256xf32>
    %c0_2 = arith.constant 0 : index
    %c0_3 = arith.constant 0 : index
    %c0_4 = arith.constant 0 : index
    %4 = vector.load %arg2[%c0_2, %c0_3, %c0_4] : memref<2x256x256xf32, #tpu.memory_space<vmem>>, vector<2x256x256xf32>
    %cst = arith.constant dense<0.000000e+00> : vector<2x256xf32>
    %5 = vector.multi_reduction <add>, %4, %cst [1] : vector<2x256x256xf32> to vector<2x256xf32>
    %6 = arith.addf %3, %5 : vector<2x256xf32>
    %c0_5 = arith.constant 0 : index
    %c0_6 = arith.constant 0 : index
    %7 = vector.load %arg12[%c0_5, %c0_6] : memref<2x256xf32, #tpu.memory_space<vmem>>, vector<2x256xf32>
    tpu.vector_store %arg12[%c0_5, %c0_6], %6 {strides = array<i32>} : memref<2x256xf32, #tpu.memory_space<vmem>>, vector<2x256xf32>,
    %c0_i32_7 = arith.constant 0 : i32
    %8 = arith.cmpi eq, %arg1, %c0_i32_7 : i32
    %9 = arith.extui %8 : i1 to i32
    %c0_i32_8 = arith.constant 0 : i32
    %10 = arith.cmpi ne, %9, %c0_i32_8 : i32
    scf.if %10 {
      %c0_9 = arith.constant 0 : index
      %c0_10 = arith.constant 0 : index
      %11 = vector.load %arg12[%c0_9, %c0_10] : memref<2x256xf32, #tpu.memory_space<vmem>>, vector<2x256xf32>
      %cst_11 = arith.constant 3.906250e-03 : f32
      %12 = vector.broadcast %cst_11 : f32 to vector<2x256xf32>
      %13 = arith.mulf %11, %12 : vector<2x256xf32>
      %c0_12 = arith.constant 0 : index
      %c0_13 = arith.constant 0 : index
      %14 = vector.load %arg3[%c0_12, %c0_13] : memref<256x16xf32, #tpu.memory_space<vmem>>, vector<256x16xf32>
      %cst_14 = arith.constant dense<0.000000e+00> : vector<2x16xf32>
      %15 = tpu.matmul %13, %14, %cst_14 {dimension_numbers = #tpu.dot_dimension_numbers<[1], [0], [0], [1], [0, 0, 1, 1], [], []>} : vector<2x256xf32>, vector<256x16xf32>, vector<2x16xf32> -> vector<2x16xf32>
      %c0_15 = arith.constant 0 : index
      %c0_16 = arith.constant 0 : index
      %16 = vector.load %arg4[%c0_15, %c0_16] : memref<1x16xf32, #tpu.memory_space<vmem>>, vector<1x16xf32>
      %17 = vector.broadcast %16 : vector<1x16xf32> to vector<2x16xf32>
      %18 = arith.addf %15, %17 : vector<2x16xf32>
      %cst_17 = arith.constant 0.000000e+00 : f32
      %19 = vector.broadcast %cst_17 : f32 to vector<2x16xf32>
      %20 = arith.maximumf %18, %19 : vector<2x16xf32>
      %c0_18 = arith.constant 0 : index
      %c0_19 = arith.constant 0 : index
      %21 = vector.load %arg5[%c0_18, %c0_19] : memref<16x256xf32, #tpu.memory_space<vmem>>, vector<16x256xf32>
      %cst_20 = arith.constant dense<0.000000e+00> : vector<2x256xf32>
      %22 = tpu.matmul %20, %21, %cst_20 {dimension_numbers = #tpu.dot_dimension_numbers<[1], [0], [0], [1], [0, 0, 1, 1], [], []>} : vector<2x16xf32>, vector<16x256xf32>, vector<2x256xf32> -> vector<2x256xf32>
      %c0_21 = arith.constant 0 : index
      %c0_22 = arith.constant 0 : index
      %23 = vector.load %arg6[%c0_21, %c0_22] : memref<1x256xf32, #tpu.memory_space<vmem>>, vector<1x256xf32>
      %24 = vector.broadcast %23 : vector<1x256xf32> to vector<2x256xf32>
      %25 = arith.addf %22, %24 : vector<2x256xf32>
      %c0_23 = arith.constant 0 : index
      %c0_24 = arith.constant 0 : index
      %26 = vector.load %arg7[%c0_23, %c0_24] : memref<256x256xf32, #tpu.memory_space<vmem>>, vector<256x256xf32>
      %cst_25 = arith.constant dense<0.000000e+00> : vector<2x256xf32>
      %27 = tpu.matmul %25, %26, %cst_25 {dimension_numbers = #tpu.dot_dimension_numbers<[1], [0], [0], [1], [0, 0, 1, 1], [], []>} : vector<2x256xf32>, vector<256x256xf32>, vector<2x256xf32> -> vector<2x256xf32>
      %28 = arith.negf %27 : vector<2x256xf32>
      %29 = math.exp %28 : vector<2x256xf32>
      %cst_26 = arith.constant 1.000000e+00 : f32
      %30 = vector.broadcast %cst_26 : f32 to vector<2x256xf32>
      %31 = arith.addf %30, %29 : vector<2x256xf32>
      %32 = arith.divf %30, %31 : vector<2x256xf32>
      %c0_27 = arith.constant 0 : index
      %c0_28 = arith.constant 0 : index
      %33 = vector.load %arg10[%c0_27, %c0_28] : memref<2x256xf32, #tpu.memory_space<vmem>>, vector<2x256xf32>
      tpu.vector_store %arg10[%c0_27, %c0_28], %32 {strides = array<i32>} : memref<2x256xf32, #tpu.memory_space<vmem>>, vector<2x256xf32>,
      %c0_29 = arith.constant 0 : index
      %c0_30 = arith.constant 0 : index
      %34 = vector.load %arg8[%c0_29, %c0_30] : memref<256x2xf32, #tpu.memory_space<vmem>>, vector<256x2xf32>
      %cst_31 = arith.constant dense<0.000000e+00> : vector<2x2xf32>
      %35 = tpu.matmul %25, %34, %cst_31 {dimension_numbers = #tpu.dot_dimension_numbers<[1], [0], [0], [1], [0, 0, 1, 1], [], []>} : vector<2x256xf32>, vector<256x2xf32>, vector<2x2xf32> -> vector<2x2xf32>
      %c0_32 = arith.constant 0 : index
      %c0_33 = arith.constant 0 : index
      %36 = vector.load %arg9[%c0_32, %c0_33] : memref<1x2xf32, #tpu.memory_space<vmem>>, vector<1x2xf32>
      %37 = vector.broadcast %36 : vector<1x2xf32> to vector<2x2xf32>
      %38 = arith.addf %35, %37 : vector<2x2xf32>
      %c0_34 = arith.constant 0 : index
      %c0_35 = arith.constant 0 : index
      %39 = vector.load %arg11[%c0_34, %c0_35] : memref<2x2xf32, #tpu.memory_space<vmem>>, vector<2x2xf32>
      tpu.vector_store %arg11[%c0_34, %c0_35], %38 {strides = array<i32>} : memref<2x2xf32, #tpu.memory_space<vmem>>, vector<2x2xf32>,
    } else {
    }
    return
  }
  func.func @transform_0(%arg0: i32, %arg1: i32) -> (i32, i32, i32) {
    %c0_i32 = arith.constant 0 : i32
    %c0_i32_0 = arith.constant 0 : i32
    return %arg0, %arg1, %c0_i32 : i32, i32, i32
  }
  func.func @transform_1(%arg0: i32, %arg1: i32) -> (i32, i32) {
    %c0_i32 = arith.constant 0 : i32
    %c0_i32_0 = arith.constant 0 : i32
    %c0_i32_1 = arith.constant 0 : i32
    return %c0_i32, %c0_i32_0 : i32, i32
  }
  func.func @transform_2(%arg0: i32, %arg1: i32) -> (i32, i32) {
    %c0_i32 = arith.constant 0 : i32
    %c0_i32_0 = arith.constant 0 : i32
    %c0_i32_1 = arith.constant 0 : i32
    return %c0_i32, %c0_i32_0 : i32, i32
  }
  func.func @transform_3(%arg0: i32, %arg1: i32) -> (i32, i32) {
    %c0_i32 = arith.constant 0 : i32
    %c0_i32_0 = arith.constant 0 : i32
    %c0_i32_1 = arith.constant 0 : i32
    return %c0_i32, %c0_i32_0 : i32, i32
  }
  func.func @transform_4(%arg0: i32, %arg1: i32) -> (i32, i32) {
    %c0_i32 = arith.constant 0 : i32
    %c0_i32_0 = arith.constant 0 : i32
    %c0_i32_1 = arith.constant 0 : i32
    return %c0_i32, %c0_i32_0 : i32, i32
  }
  func.func @transform_5(%arg0: i32, %arg1: i32) -> (i32, i32) {
    %c0_i32 = arith.constant 0 : i32
    %c0_i32_0 = arith.constant 0 : i32
    %c0_i32_1 = arith.constant 0 : i32
    return %c0_i32, %c0_i32_0 : i32, i32
  }
  func.func @transform_6(%arg0: i32, %arg1: i32) -> (i32, i32) {
    %c0_i32 = arith.constant 0 : i32
    %c0_i32_0 = arith.constant 0 : i32
    %c0_i32_1 = arith.constant 0 : i32
    return %c0_i32, %c0_i32_0 : i32, i32
  }
  func.func @transform_7(%arg0: i32, %arg1: i32) -> (i32, i32) {
    %c0_i32 = arith.constant 0 : i32
    %c0_i32_0 = arith.constant 0 : i32
    %c0_i32_1 = arith.constant 0 : i32
    return %c0_i32, %c0_i32_0 : i32, i32
  }
  func.func @transform_8(%arg0: i32, %arg1: i32) -> (i32, i32) {
    %c0_i32 = arith.constant 0 : i32
    %c0_i32_0 = arith.constant 0 : i32
    return %arg0, %c0_i32 : i32, i32
  }
  func.func @transform_9(%arg0: i32, %arg1: i32) -> (i32, i32) {
    %c0_i32 = arith.constant 0 : i32
    %c0_i32_0 = arith.constant 0 : i32
    return %arg0, %c0_i32 : i32, i32
  }
}

</mosaic_0001>

<llo_original>
// kernel: tpu_custom_call.1
$region0: #{tpu_custom_call.1}
  #allocation0 [shape = 'u32[]', space=smem, size = 0x4, offset = 0x4, fixed_abs, tag = 'smem constant byte address 0x4 - core index']
  #allocation1 [shape = 'u32[144,128]{1,0:T(1,128)}', space=vmem, size = 0x12000, scoped, tag = 'internal scratch']
  #allocation2 [shape = 'f32[2,256]{1,0:T(2,128)}', space=vmem, size = 0x800, scoped, tag = 'scratch operand']
  %s0 = inlined_call_operand.hbm [shape: f32[2,256,256], index: 0, kind: input, shape index: {}]
  %s1 = inlined_call_operand.vmem [shape: f32[256,16], index: 1, kind: input, shape index: {}]
  %s2 = inlined_call_operand.vmem [shape: f32[1,16], index: 2, kind: input, shape index: {}]
  %s3 = inlined_call_operand.vmem [shape: f32[16,256], index: 3, kind: input, shape index: {}]
  %s4 = inlined_call_operand.vmem [shape: f32[1,256], index: 4, kind: input, shape index: {}]
  %s5 = inlined_call_operand.vmem [shape: f32[256,256], index: 5, kind: input, shape index: {}]
  %s6 = inlined_call_operand.vmem [shape: f32[256,2], index: 6, kind: input, shape index: {}]
  %s7 = inlined_call_operand.vmem [shape: f32[1,2], index: 7, kind: input, shape index: {}]
  %s8 = inlined_call_operand.hbm [shape: f32[2,256], index: 8, kind: output, shape index: {0}]
  %s9 = inlined_call_operand.hbm [shape: f32[2,2], index: 9, kind: output, shape index: {1}]
  %10 = xla_tuple %s8, %s9
  %s11 = sld [smem:[#allocation0]]
  $region62: #{tpu_custom_call.1} parent=0
    _
  %s13 = ssub.s32 1, %s11
  %s14 = scalar_select 0, %s13, %s11
  $region1: #{tpu_custom_call.1} parent=0
    #allocation3 [shape = 'u8[524288]{0}', space=vmem, size = 0x80000, scoped, tag = 'input window, operand 0, single buffered']
    #allocation4 [shape = 's32[1]{0}', space=sflag, size = 0x4, scoped, tag = 'scoped memory for tpu_custom_call.1']
    #allocation5 [shape = 's32[1]{0}', space=sflag, size = 0x4, scoped, tag = 'scoped memory for tpu_custom_call.1']
    #allocation6 [shape = 'u8[2048]{0}', space=vmem, size = 0x800, scoped, tag = 'output window, operand 0, single buffered']
    #allocation7 [shape = 'u8[1024]{0}', space=vmem, size = 0x400, scoped, tag = 'output window, operand 1, single buffered']
    #allocation8 [shape = 's32[1]{0}', space=sflag, size = 0x4, scoped, tag = 'scoped memory for tpu_custom_call.1']
    %15 = vsyncpa [#allocation4], 0
    %16 = vsyncpa [#allocation5], 0
    %17 = vsyncpa [#allocation8], 0
    // Predicated region
    $region2: #{tpu_custom_call.1} parent=1 // pred_check
      _
    $region3: #{tpu_custom_call.1} parent=1 // pred_check_branch
      %19 = sbr.rel (0) target = $region5
    $region4: #{tpu_custom_call.1} parent=1 // pred_region
      %s21 = ssub.s32 16384, 16384
      %22 = vsyncadd [#allocation4], %s21
      %s23 = sshll.u32 [#allocation3], 4
      %s24 = int_to_ptr.vmem [resolvable:$true] %s23
      %29 = dma.hbm_to_vmem [thread:$0]  %s0, 16384, %s24, [#allocation4], 256, 256, 16
    $region5: #{tpu_custom_call.1} parent=1 // pred_fallthru
      _
    // Predicated region
    $region6: #{tpu_custom_call.1} parent=1 // pred_check
      _
    $region7: #{tpu_custom_call.1} parent=1 // pred_check_branch
      %31 = sbr.rel (0) target = $region9
    $region8: #{tpu_custom_call.1} parent=1 // pred_region
      _
    $region9: #{tpu_custom_call.1} parent=1 // pred_fallthru
      _
    // Predicated region
    $region10: #{tpu_custom_call.1} parent=1 // pred_check
      _
    $region11: #{tpu_custom_call.1} parent=1 // pred_check_branch
      %33 = sbr.rel (0) target = $region13
    $region12: #{tpu_custom_call.1} parent=1 // pred_region
      _
    $region13: #{tpu_custom_call.1} parent=1 // pred_fallthru
      _
    // Predicated region
    $region14: #{tpu_custom_call.1} parent=1 // pred_check
      _
    $region15: #{tpu_custom_call.1} parent=1 // pred_check_branch
      %35 = sbr.rel (0) target = $region17
    $region16: #{tpu_custom_call.1} parent=1 // pred_region
      _
    $region17: #{tpu_custom_call.1} parent=1 // pred_fallthru
      _
    // Predicated region
    $region18: #{tpu_custom_call.1} parent=1 // pred_check
      _
    $region19: #{tpu_custom_call.1} parent=1 // pred_check_branch
      %37 = sbr.rel (0) target = $region21
    $region20: #{tpu_custom_call.1} parent=1 // pred_region
      _
    $region21: #{tpu_custom_call.1} parent=1 // pred_fallthru
      _
    // Predicated region
    $region22: #{tpu_custom_call.1} parent=1 // pred_check
      _
    $region23: #{tpu_custom_call.1} parent=1 // pred_check_branch
      %39 = sbr.rel (0) target = $region25
    $region24: #{tpu_custom_call.1} parent=1 // pred_region
      _
    $region25: #{tpu_custom_call.1} parent=1 // pred_fallthru
      _
    // Predicated region
    $region26: #{tpu_custom_call.1} parent=1 // pred_check
      _
    $region27: #{tpu_custom_call.1} parent=1 // pred_check_branch
      %41 = sbr.rel (0) target = $region29
    $region28: #{tpu_custom_call.1} parent=1 // pred_region
      _
    $region29: #{tpu_custom_call.1} parent=1 // pred_fallthru
      _
    // Predicated region
    $region30: #{tpu_custom_call.1} parent=1 // pred_check
      _
    $region31: #{tpu_custom_call.1} parent=1 // pred_check_branch
      %43 = sbr.rel (0) target = $region33
    $region32: #{tpu_custom_call.1} parent=1 // pred_region
      _
    $region33: #{tpu_custom_call.1} parent=1 // pred_fallthru
      _
    // Predicated region
    $region34: #{tpu_custom_call.1} parent=1 // pred_check
      _
    $region35: #{tpu_custom_call.1} parent=1 // pred_check_branch
      %45 = sbr.rel (0) target = $region37
    $region36: #{tpu_custom_call.1} parent=1 // pred_region
      %46 = dma.done [#allocation4], 16384
    $region37: #{tpu_custom_call.1} parent=1 // pred_fallthru
      _
    %p47 = scmp.eq.s32.totalorder 0, 0
    // Predicated region
    $region38: #{tpu_custom_call.1} parent=1 // pred_check
      %p48 = pneg %p47
    $region39: #{tpu_custom_call.1} parent=1 // pred_check_branch
      %50 = sbr.rel (%p48) target = $region41
    $region40: #{tpu_custom_call.1} parent=1 // pred_region
      %51 = vst [vmem:[#allocation2] sm:$0xf] 0.0
    $region41: #{tpu_custom_call.1} parent=1 // pred_fallthru
      _
    %v52 = vld [vmem:[#allocation2] sm:$0xf]
    %v53 = vld [vmem:[#allocation3] sm:$0xff]
    %v54 = vld [vmem:[#allocation3 + $0x8] sm:$0xff]
    %v55 = vld [vmem:[#allocation3 + $0x10] sm:$0xff]
    %v56 = vld [vmem:[#allocation3 + $0x18] sm:$0xff]
    %v57 = vld [vmem:[#allocation3 + $0x20] sm:$0xff]
    %v58 = vld [vmem:[#allocation3 + $0x28] sm:$0xff]
    %v59 = vld [vmem:[#allocation3 + $0x30] sm:$0xff]
    %v60 = vld [vmem:[#allocation3 + $0x38] sm:$0xff]
    %v61 = vld [vmem:[#allocation3 + $0x40] sm:$0xff]
    %v62 = vld [vmem:[#allocation3 + $0x48] sm:$0xff]
    %v63 = vld [vmem:[#allocation3 + $0x50] sm:$0xff]
    %v64 = vld [vmem:[#allocation3 + $0x58] sm:$0xff]
    %v65 = vld [vmem:[#allocation3 + $0x60] sm:$0xff]
    %v66 = vld [vmem:[#allocation3 + $0x68] sm:$0xff]
    %v67 = vld [vmem:[#allocation3 + $0x70] sm:$0xff]
    %v68 = vld [vmem:[#allocation3 + $0x78] sm:$0xff]
    %v69 = vld [vmem:[#allocation3 + $0x80] sm:$0xff]
    %v70 = vld [vmem:[#allocation3 + $0x88] sm:$0xff]
    %v71 = vld [vmem:[#allocation3 + $0x90] sm:$0xff]
    %v72 = vld [vmem:[#allocation3 + $0x98] sm:$0xff]
    %v73 = vld [vmem:[#allocation3 + $0xa0] sm:$0xff]
    %v74 = vld [vmem:[#allocation3 + $0xa8] sm:$0xff]
    %v75 = vld [vmem:[#allocation3 + $0xb0] sm:$0xff]
    %v76 = vld [vmem:[#allocation3 + $0xb8] sm:$0xff]
    %v77 = vld [vmem:[#allocation3 + $0xc0] sm:$0xff]
    %v78 = vld [vmem:[#allocation3 + $0xc8] sm:$0xff]
    %v79 = vld [vmem:[#allocation3 + $0xd0] sm:$0xff]
    %v80 = vld [vmem:[#allocation3 + $0xd8] sm:$0xff]
    %v81 = vld [vmem:[#allocation3 + $0xe0] sm:$0xff]
    %v82 = vld [vmem:[#allocation3 + $0xe8] sm:$0xff]
    %v83 = vld [vmem:[#allocation3 + $0xf0] sm:$0xff]
    %v84 = vld [vmem:[#allocation3 + $0xf8] sm:$0xff]
    %v85 = vld [vmem:[#allocation3 + $0x100] sm:$0xff]
    %v86 = vld [vmem:[#allocation3 + $0x108] sm:$0xff]
    %v87 = vld [vmem:[#allocation3 + $0x110] sm:$0xff]
    %v88 = vld [vmem:[#allocation3 + $0x118] sm:$0xff]
    %v89 = vld [vmem:[#allocation3 + $0x120] sm:$0xff]
    %v90 = vld [vmem:[#allocation3 + $0x128] sm:$0xff]
    %v91 = vld [vmem:[#allocation3 + $0x130] sm:$0xff]
    %v92 = vld [vmem:[#allocation3 + $0x138] sm:$0xff]
    %v93 = vld [vmem:[#allocation3 + $0x140] sm:$0xff]
    %v94 = vld [vmem:[#allocation3 + $0x148] sm:$0xff]
    %v95 = vld [vmem:[#allocation3 + $0x150] sm:$0xff]
    %v96 = vld [vmem:[#allocation3 + $0x158] sm:$0xff]
    %v97 = vld [vmem:[#allocation3 + $0x160] sm:$0xff]
    %v98 = vld [vmem:[#allocation3 + $0x168] sm:$0xff]
    %v99 = vld [vmem:[#allocation3 + $0x170] sm:$0xff]
    %v100 = vld [vmem:[#allocation3 + $0x178] sm:$0xff]
    %v101 = vld [vmem:[#allocation3 + $0x180] sm:$0xff]
    %v102 = vld [vmem:[#allocation3 + $0x188] sm:$0xff]
    %v103 = vld [vmem:[#allocation3 + $0x190] sm:$0xff]
    %v104 = vld [vmem:[#allocation3 + $0x198] sm:$0xff]
    %v105 = vld [vmem:[#allocation3 + $0x1a0] sm:$0xff]
    %v106 = vld [vmem:[#allocation3 + $0x1a8] sm:$0xff]
    %v107 = vld [vmem:[#allocation3 + $0x1b0] sm:$0xff]
    %v108 = vld [vmem:[#allocation3 + $0x1b8] sm:$0xff]
    %v109 = vld [vmem:[#allocation3 + $0x1c0] sm:$0xff]
    %v110 = vld [vmem:[#allocation3 + $0x1c8] sm:$0xff]
    %v111 = vld [vmem:[#allocation3 + $0x1d0] sm:$0xff]
    %v112 = vld [vmem:[#allocation3 + $0x1d8] sm:$0xff]
    %v113 = vld [vmem:[#allocation3 + $0x1e0] sm:$0xff]
    %v114 = vld [vmem:[#allocation3 + $0x1e8] sm:$0xff]
    %v115 = vld [vmem:[#allocation3 + $0x1f0] sm:$0xff]
    %v116 = vld [vmem:[#allocation3 + $0x1f8] sm:$0xff]
    %v117 = vld [vmem:[#allocation3 + $0x200] sm:$0xff]
    %v118 = vld [vmem:[#allocation3 + $0x208] sm:$0xff]
    %v119 = vld [vmem:[#allocation3 + $0x210] sm:$0xff]
    %v120 = vld [vmem:[#allocation3 + $0x218] sm:$0xff]
    %v121 = vld [vmem:[#allocation3 + $0x220] sm:$0xff]
    %v122 = vld [vmem:[#allocation3 + $0x228] sm:$0xff]
    %v123 = vld [vmem:[#allocation3 + $0x230] sm:$0xff]
    %v124 = vld [vmem:[#allocation3 + $0x238] sm:$0xff]
    %v125 = vld [vmem:[#allocation3 + $0x240] sm:$0xff]
    %v126 = vld [vmem:[#allocation3 + $0x248] sm:$0xff]
    %v127 = vld [vmem:[#allocation3 + $0x250] sm:$0xff]
    %v128 = vld [vmem:[#allocation3 + $0x258] sm:$0xff]
    %v129 = vld [vmem:[#allocation3 + $0x260] sm:$0xff]
    %v130 = vld [vmem:[#allocation3 + $0x268] sm:$0xff]
    %v131 = vld [vmem:[#allocation3 + $0x270] sm:$0xff]
    %v132 = vld [vmem:[#allocation3 + $0x278] sm:$0xff]
    %v133 = vld [vmem:[#allocation3 + $0x280] sm:$0xff]
    %v134 = vld [vmem:[#allocation3 + $0x288] sm:$0xff]
    %v135 = vld [vmem:[#allocation3 + $0x290] sm:$0xff]
    %v136 = vld [vmem:[#allocation3 + $0x298] sm:$0xff]
    %v137 = vld [vmem:[#allocation3 + $0x2a0] sm:$0xff]
    %v138 = vld [vmem:[#allocation3 + $0x2a8] sm:$0xff]
    %v139 = vld [vmem:[#allocation3 + $0x2b0] sm:$0xff]
    %v140 = vld [vmem:[#allocation3 + $0x2b8] sm:$0xff]
    %v141 = vld [vmem:[#allocation3 + $0x2c0] sm:$0xff]
    %v142 = vld [vmem:[#allocation3 + $0x2c8] sm:$0xff]
    %v143 = vld [vmem:[#allocation3 + $0x2d0] sm:$0xff]
    %v144 = vld [vmem:[#allocation3 + $0x2d8] sm:$0xff]
    %v145 = vld [vmem:[#allocation3 + $0x2e0] sm:$0xff]
    %v146 = vld [vmem:[#allocation3 + $0x2e8] sm:$0xff]
    %v147 = vld [vmem:[#allocation3 + $0x2f0] sm:$0xff]
    %v148 = vld [vmem:[#allocation3 + $0x2f8] sm:$0xff]
    %v149 = vld [vmem:[#allocation3 + $0x300] sm:$0xff]
    %v150 = vld [vmem:[#allocation3 + $0x308] sm:$0xff]
    %v151 = vld [vmem:[#allocation3 + $0x310] sm:$0xff]
    %v152 = vld [vmem:[#allocation3 + $0x318] sm:$0xff]
    %v153 = vld [vmem:[#allocation3 + $0x320] sm:$0xff]
    %v154 = vld [vmem:[#allocation3 + $0x328] sm:$0xff]
    %v155 = vld [vmem:[#allocation3 + $0x330] sm:$0xff]
    %v156 = vld [vmem:[#allocation3 + $0x338] sm:$0xff]
    %v157 = vld [vmem:[#allocation3 + $0x340] sm:$0xff]
    %v158 = vld [vmem:[#allocation3 + $0x348] sm:$0xff]
    %v159 = vld [vmem:[#allocation3 + $0x350] sm:$0xff]
    %v160 = vld [vmem:[#allocation3 + $0x358] sm:$0xff]
    %v161 = vld [vmem:[#allocation3 + $0x360] sm:$0xff]
    %v162 = vld [vmem:[#allocation3 + $0x368] sm:$0xff]
    %v163 = vld [vmem:[#allocation3 + $0x370] sm:$0xff]
    %v164 = vld [vmem:[#allocation3 + $0x378] sm:$0xff]
    %v165 = vld [vmem:[#allocation3 + $0x380] sm:$0xff]
    %v166 = vld [vmem:[#allocation3 + $0x388] sm:$0xff]
    %v167 = vld [vmem:[#allocation3 + $0x390] sm:$0xff]
    %v168 = vld [vmem:[#allocation3 + $0x398] sm:$0xff]
    %v169 = vld [vmem:[#allocation3 + $0x3a0] sm:$0xff]
    %v170 = vld [vmem:[#allocation3 + $0x3a8] sm:$0xff]
    %v171 = vld [vmem:[#allocation3 + $0x3b0] sm:$0xff]
    %v172 = vld [vmem:[#allocation3 + $0x3b8] sm:$0xff]
    %v173 = vld [vmem:[#allocation3 + $0x3c0] sm:$0xff]
    %v174 = vld [vmem:[#allocation3 + $0x3c8] sm:$0xff]
    %v175 = vld [vmem:[#allocation3 + $0x3d0] sm:$0xff]
    %v176 = vld [vmem:[#allocation3 + $0x3d8] sm:$0xff]
    %v177 = vld [vmem:[#allocation3 + $0x3e0] sm:$0xff]
    %v178 = vld [vmem:[#allocation3 + $0x3e8] sm:$0xff]
    %v179 = vld [vmem:[#allocation3 + $0x3f0] sm:$0xff]
    %v180 = vld [vmem:[#allocation3 + $0x3f8] sm:$0xff]
    %v181 = vadd.f32 %v53, %v55
    %v182 = vadd.f32 %v181, %v57
    %v183 = vadd.f32 %v182, %v59
    %v184 = vadd.f32 %v183, %v61
    %v185 = vadd.f32 %v184, %v63
    %v186 = vadd.f32 %v185, %v65
    %v187 = vadd.f32 %v186, %v67
    %v188 = vadd.f32 %v187, %v69
    %v189 = vadd.f32 %v188, %v71
    %v190 = vadd.f32 %v189, %v73
    %v191 = vadd.f32 %v190, %v75
    %v192 = vadd.f32 %v191, %v77
    %v193 = vadd.f32 %v192, %v79
    %v194 = vadd.f32 %v193, %v81
    %v195 = vadd.f32 %v194, %v83
    %v196 = vadd.f32 %v195, %v85
    %v197 = vadd.f32 %v196, %v87
    %v198 = vadd.f32 %v197, %v89
    %v199 = vadd.f32 %v198, %v91
    %v200 = vadd.f32 %v199, %v93
    %v201 = vadd.f32 %v200, %v95
    %v202 = vadd.f32 %v201, %v97
    %v203 = vadd.f32 %v202, %v99
    %v204 = vadd.f32 %v203, %v101
    %v205 = vadd.f32 %v204, %v103
    %v206 = vadd.f32 %v205, %v105
    %v207 = vadd.f32 %v206, %v107
    %v208 = vadd.f32 %v207, %v109
    %v209 = vadd.f32 %v208, %v111
    %v210 = vadd.f32 %v209, %v113
    %v211 = vadd.f32 %v210, %v115
    %v212 = vrot.slane %v211, 4
    %v213 = vadd.f32 %v211, %v212
    %v214 = vrot.slane %v213, 2
    %v215 = vadd.f32 %v213, %v214
    %v216 = vrot.slane %v215, 1
    %v217 = vadd.f32 %v215, %v216
    %v218 = vadd.f32 %v54, %v56
    %v219 = vadd.f32 %v218, %v58
    %v220 = vadd.f32 %v219, %v60
    %v221 = vadd.f32 %v220, %v62
    %v222 = vadd.f32 %v221, %v64
    %v223 = vadd.f32 %v222, %v66
    %v224 = vadd.f32 %v223, %v68
    %v225 = vadd.f32 %v224, %v70
    %v226 = vadd.f32 %v225, %v72
    %v227 = vadd.f32 %v226, %v74
    %v228 = vadd.f32 %v227, %v76
    %v229 = vadd.f32 %v228, %v78
    %v230 = vadd.f32 %v229, %v80
    %v231 = vadd.f32 %v230, %v82
    %v232 = vadd.f32 %v231, %v84
    %v233 = vadd.f32 %v232, %v86
    %v234 = vadd.f32 %v233, %v88
    %v235 = vadd.f32 %v234, %v90
    %v236 = vadd.f32 %v235, %v92
    %v237 = vadd.f32 %v236, %v94
    %v238 = vadd.f32 %v237, %v96
    %v239 = vadd.f32 %v238, %v98
    %v240 = vadd.f32 %v239, %v100
    %v241 = vadd.f32 %v240, %v102
    %v242 = vadd.f32 %v241, %v104
    %v243 = vadd.f32 %v242, %v106
    %v244 = vadd.f32 %v243, %v108
    %v245 = vadd.f32 %v244, %v110
    %v246 = vadd.f32 %v245, %v112
    %v247 = vadd.f32 %v246, %v114
    %v248 = vadd.f32 %v247, %v116
    %v249 = vrot.slane %v248, 4
    %v250 = vadd.f32 %v248, %v249
    %v251 = vrot.slane %v250, 2
    %v252 = vadd.f32 %v250, %v251
    %v253 = vrot.slane %v252, 1
    %v254 = vadd.f32 %v252, %v253
    %v255 = vadd.f32 %v117, %v119
    %v256 = vadd.f32 %v255, %v121
    %v257 = vadd.f32 %v256, %v123
    %v258 = vadd.f32 %v257, %v125
    %v259 = vadd.f32 %v258, %v127
    %v260 = vadd.f32 %v259, %v129
    %v261 = vadd.f32 %v260, %v131
    %v262 = vadd.f32 %v261, %v133
    %v263 = vadd.f32 %v262, %v135
    %v264 = vadd.f32 %v263, %v137
    %v265 = vadd.f32 %v264, %v139
    %v266 = vadd.f32 %v265, %v141
    %v267 = vadd.f32 %v266, %v143
    %v268 = vadd.f32 %v267, %v145
    %v269 = vadd.f32 %v268, %v147
    %v270 = vadd.f32 %v269, %v149
    %v271 = vadd.f32 %v270, %v151
    %v272 = vadd.f32 %v271, %v153
    %v273 = vadd.f32 %v272, %v155
    %v274 = vadd.f32 %v273, %v157
    %v275 = vadd.f32 %v274, %v159
    %v276 = vadd.f32 %v275, %v161
    %v277 = vadd.f32 %v276, %v163
    %v278 = vadd.f32 %v277, %v165
    %v279 = vadd.f32 %v278, %v167
    %v280 = vadd.f32 %v279, %v169
    %v281 = vadd.f32 %v280, %v171
    %v282 = vadd.f32 %v281, %v173
    %v283 = vadd.f32 %v282, %v175
    %v284 = vadd.f32 %v283, %v177
    %v285 = vadd.f32 %v284, %v179
    %v286 = vrot.slane %v285, 4
    %v287 = vadd.f32 %v285, %v286
    %v288 = vrot.slane %v287, 2
    %v289 = vadd.f32 %v287, %v288
    %v290 = vrot.slane %v289, 1
    %v291 = vadd.f32 %v289, %v290
    %v292 = vadd.f32 %v118, %v120
    %v293 = vadd.f32 %v292, %v122
    %v294 = vadd.f32 %v293, %v124
    %v295 = vadd.f32 %v294, %v126
    %v296 = vadd.f32 %v295, %v128
    %v297 = vadd.f32 %v296, %v130
    %v298 = vadd.f32 %v297, %v132
    %v299 = vadd.f32 %v298, %v134
    %v300 = vadd.f32 %v299, %v136
    %v301 = vadd.f32 %v300, %v138
    %v302 = vadd.f32 %v301, %v140
    %v303 = vadd.f32 %v302, %v142
    %v304 = vadd.f32 %v303, %v144
    %v305 = vadd.f32 %v304, %v146
    %v306 = vadd.f32 %v305, %v148
    %v307 = vadd.f32 %v306, %v150
    %v308 = vadd.f32 %v307, %v152
    %v309 = vadd.f32 %v308, %v154
    %v310 = vadd.f32 %v309, %v156
    %v311 = vadd.f32 %v310, %v158
    %v312 = vadd.f32 %v311, %v160
    %v313 = vadd.f32 %v312, %v162
    %v314 = vadd.f32 %v313, %v164
    %v315 = vadd.f32 %v314, %v166
    %v316 = vadd.f32 %v315, %v168
    %v317 = vadd.f32 %v316, %v170
    %v318 = vadd.f32 %v317, %v172
    %v319 = vadd.f32 %v318, %v174
    %v320 = vadd.f32 %v319, %v176
    %v321 = vadd.f32 %v320, %v178
    %v322 = vadd.f32 %v321, %v180
    %v323 = vrot.slane %v322, 4
    %v324 = vadd.f32 %v322, %v323
    %v325 = vrot.slane %v324, 2
    %v326 = vadd.f32 %v324, %v325
    %v327 = vrot.slane %v326, 1
    %v328 = vadd.f32 %v326, %v327
    %v333 = vcombine.low %v217, %v254
    %v335 = vunpack.c.l.s4 1983009808
    %v336 = vunpack.c.0.s8 %v335
    %v337 = vlaneseq
    %v338 = vshrl.u32 %v337, 7
    %v339 = vsub.s32 %v336, %v338
    %v340 = vrot.slane %v333, %v339
    %v341 = vcombine.low %v291, %v328
    %v343 = vunpack.c.l.s4 1983009808
    %v344 = vunpack.c.0.s8 %v343
    %v345 = vlaneseq
    %v346 = vshrl.u32 %v345, 7
    %v347 = vsub.s32 %v344, %v346
    %v348 = vrot.slane %v341, %v347
    %vm349 = vcmask 1044484
    %v350 = vsel %vm349, %v340, %v340
    %vm351 = vcmask 1046534
    %v352 = vsel %vm351, %v340, %v350
    %v353 = vrot.slane %v348, 7
    %vm354 = vcmask 1041409
    %v355 = vsel %vm354, %v353, %v352
    %vm356 = vcmask 1043459
    %v357 = vsel %vm356, %v353, %v355
    %vm358 = vcmask 1045509
    %v359 = vsel %vm358, %v353, %v357
    %vm360 = vcmask 1047559
    %v361 = vsel %vm360, %v353, %v359
    %v363 = vadd.f32 %v52, %v361
    %364 = vst [vmem:[#allocation2] sm:$0xf] %v363
    // Predicated region
    $region42: #{tpu_custom_call.1} parent=1 // pred_check
      %p365 = pneg %p47
    $region43: #{tpu_custom_call.1} parent=1 // pred_check_branch
      %367 = sbr.rel (%p365) target = $region45
    $region44: #{tpu_custom_call.1} parent=1 // pred_region
      %v368 = vld [vmem:[#allocation2] sm:$0xf]
      %v369 = vmul.f32 %v368, 0.00390625
      %v370 = vld [vmem:[%s1] sm:$0xff]
      %v371 = vld [vmem:[%s1 + $0x8] sm:$0xff]
      %v372 = vld [vmem:[%s1 + $0x10] sm:$0xff]
      %v373 = vld [vmem:[%s1 + $0x18] sm:$0xff]
      %v374 = vld [vmem:[%s1 + $0x20] sm:$0xff]
      %v375 = vld [vmem:[%s1 + $0x28] sm:$0xff]
      %v376 = vld [vmem:[%s1 + $0x30] sm:$0xff]
      %v377 = vld [vmem:[%s1 + $0x38] sm:$0xff]
      %v378 = vld [vmem:[%s1 + $0x40] sm:$0xff]
      %v379 = vld [vmem:[%s1 + $0x48] sm:$0xff]
      %v380 = vld [vmem:[%s1 + $0x50] sm:$0xff]
      %v381 = vld [vmem:[%s1 + $0x58] sm:$0xff]
      %v382 = vld [vmem:[%s1 + $0x60] sm:$0xff]
      %v383 = vld [vmem:[%s1 + $0x68] sm:$0xff]
      %v384 = vld [vmem:[%s1 + $0x70] sm:$0xff]
      %v385 = vld [vmem:[%s1 + $0x78] sm:$0xff]
      %v386 = vld [vmem:[%s1 + $0x80] sm:$0xff]
      %v387 = vld [vmem:[%s1 + $0x88] sm:$0xff]
      %v388 = vld [vmem:[%s1 + $0x90] sm:$0xff]
      %v389 = vld [vmem:[%s1 + $0x98] sm:$0xff]
      %v390 = vld [vmem:[%s1 + $0xa0] sm:$0xff]
      %v391 = vld [vmem:[%s1 + $0xa8] sm:$0xff]
      %v392 = vld [vmem:[%s1 + $0xb0] sm:$0xff]
      %v393 = vld [vmem:[%s1 + $0xb8] sm:$0xff]
      %v394 = vld [vmem:[%s1 + $0xc0] sm:$0xff]
      %v395 = vld [vmem:[%s1 + $0xc8] sm:$0xff]
      %v396 = vld [vmem:[%s1 + $0xd0] sm:$0xff]
      %v397 = vld [vmem:[%s1 + $0xd8] sm:$0xff]
      %v398 = vld [vmem:[%s1 + $0xe0] sm:$0xff]
      %v399 = vld [vmem:[%s1 + $0xe8] sm:$0xff]
      %v400 = vld [vmem:[%s1 + $0xf0] sm:$0xff]
      %v401 = vld [vmem:[%s1 + $0xf8] sm:$0xff]
      %v402 = vld [vmem:[%s2] sm:$0x1]
      %v404 = vlaneseq
      %v405 = vshrl.u32 %v404, 7
      %v406 = vsub.s32 0, %v405
      %v407 = vrot.slane %v402, %v406
      %v411 = vunpack.c.l.s4 1983009808
      %v412 = vunpack.c.0.s8 %v411
      %v413 = vlaneseq
      %v414 = vshrl.u32 %v413, 7
      %v415 = vsub.s32 %v412, %v414
      %v416 = vrot.slane %v369, %v415
      %v417 = vcombine.high %v416, %v416
      %420 = vmatprep.subr.mxu0 0.0
      %421 = vmatpush1.msra.mxu0 %v385
      %422 = vmatprep.subr.mxu0 0.0
      %423 = vmatpush1.msra.mxu0 %v384
      %424 = vmatprep.subr.mxu0 0.0
      %425 = vmatpush1.msra.mxu0 %v383
      %426 = vmatprep.subr.mxu0 0.0
      %427 = vmatpush1.msra.mxu0 %v382
      %428 = vmatprep.subr.mxu0 0.0
      %429 = vmatpush1.msra.mxu0 %v381
      %430 = vmatprep.subr.mxu0 0.0
      %431 = vmatpush1.msra.mxu0 %v380
      %432 = vmatprep.subr.mxu0 0.0
      %433 = vmatpush1.msra.mxu0 %v379
      %434 = vmatprep.subr.mxu0 0.0
      %435 = vmatpush1.msra.mxu0 %v378
      %436 = vmatprep.subr.mxu0 0.0
      %437 = vmatpush1.msra.mxu0 %v377
      %438 = vmatprep.subr.mxu0 0.0
      %439 = vmatpush1.msra.mxu0 %v376
      %440 = vmatprep.subr.mxu0 0.0
      %441 = vmatpush1.msra.mxu0 %v375
      %442 = vmatprep.subr.mxu0 0.0
      %443 = vmatpush1.msra.mxu0 %v374
      %444 = vmatprep.subr.mxu0 0.0
      %445 = vmatpush1.msra.mxu0 %v373
      %446 = vmatprep.subr.mxu0 0.0
      %447 = vmatpush1.msra.mxu0 %v372
      %448 = vmatprep.subr.mxu0 0.0
      %449 = vmatpush1.msra.mxu0 %v371
      %450 = vmatprep.subr.mxu0 0.0
      %451 = vmatpush1.msra.mxu0 %v370
      %452 = vmatprep.subr.mxu0 0.0
      %453 = vmatpush2.msra.mxu0 %v401
      %454 = vmatprep.subr.mxu0 0.0
      %455 = vmatpush2.msra.mxu0 %v400
      %456 = vmatprep.subr.mxu0 0.0
      %457 = vmatpush2.msra.mxu0 %v399
      %458 = vmatprep.subr.mxu0 0.0
      %459 = vmatpush2.msra.mxu0 %v398
      %460 = vmatprep.subr.mxu0 0.0
      %461 = vmatpush2.msra.mxu0 %v397
      %462 = vmatprep.subr.mxu0 0.0
      %463 = vmatpush2.msra.mxu0 %v396
      %464 = vmatprep.subr.mxu0 0.0
      %465 = vmatpush2.msra.mxu0 %v395
      %466 = vmatprep.subr.mxu0 0.0
      %467 = vmatpush2.msra.mxu0 %v394
      %468 = vmatprep.subr.mxu0 0.0
      %469 = vmatpush2.msra.mxu0 %v393
      %470 = vmatprep.subr.mxu0 0.0
      %471 = vmatpush2.msra.mxu0 %v392
      %472 = vmatprep.subr.mxu0 0.0
      %473 = vmatpush2.msra.mxu0 %v391
      %474 = vmatprep.subr.mxu0 0.0
      %475 = vmatpush2.msra.mxu0 %v390
      %476 = vmatprep.subr.mxu0 0.0
      %477 = vmatpush2.msra.mxu0 %v389
      %478 = vmatprep.subr.mxu0 0.0
      %479 = vmatpush2.msra.mxu0 %v388
      %480 = vmatprep.subr.mxu0 0.0
      %481 = vmatpush2.msra.mxu0 %v387
      %482 = vmatprep.subr.mxu0 0.0
      %483 = vmatpush2.msra.mxu0 %v386
      %484 = vmatprep.mubr.f32.mxu0 %v417
      %485 = vmatmul.mubr.f32.gmra.mxu0 %v416
      %v486 = vpop.f32.mrf.mxu0
      %v487 = vadd.f32 %v407, %v486
      %v488 = vpop.f32.mrf.mxu0
      %489 = vdwg.mxu0
      %v490 = vmax.f32 %v487, 0.0
      %v491 = vld [vmem:[%s3] sm:$0xff]
      %v492 = vld [vmem:[%s3 + $0x8] sm:$0xff]
      %v493 = vld [vmem:[%s3 + $0x10] sm:$0xff]
      %v494 = vld [vmem:[%s3 + $0x18] sm:$0xff]
      %v495 = vld [vmem:[%s4] sm:$0x3]
      %v497 = vlaneseq
      %v498 = vshrl.u32 %v497, 7
      %v499 = vsub.s32 0, %v498
      %v500 = vrot.slane %v495, %v499
      %v501 = vlaneseq
      %v502 = vshrl.u32 %v501, 7
      %v503 = vsub.s32 1, %v502
      %v504 = vrot.slane %v495, %v503
      %vm507 = vcmask 130048
      %v509 = vsel %vm507, %v490, 0
      %511 = vmatprep.subr.mxu0 0.0
      %512 = vmatpush1.msra.mxu0 0.0
      %513 = vmatprep.subr.mxu0 0.0
      %514 = vmatpush1.msra.mxu0 0.0
      %515 = vmatprep.subr.mxu0 0.0
      %516 = vmatpush1.msra.mxu0 0.0
      %517 = vmatprep.subr.mxu0 0.0
      %518 = vmatpush1.msra.mxu0 0.0
      %519 = vmatprep.subr.mxu0 0.0
      %520 = vmatpush1.msra.mxu0 0.0
      %521 = vmatprep.subr.mxu0 0.0
      %522 = vmatpush1.msra.mxu0 0.0
      %523 = vmatprep.subr.mxu0 0.0
      %524 = vmatpush1.msra.mxu0 0.0
      %525 = vmatprep.subr.mxu0 0.0
      %526 = vmatpush1.msra.mxu0 0.0
      %527 = vmatprep.subr.mxu0 0.0
      %528 = vmatpush1.msra.mxu0 0.0
      %529 = vmatprep.subr.mxu0 0.0
      %530 = vmatpush1.msra.mxu0 0.0
      %531 = vmatprep.subr.mxu0 0.0
      %532 = vmatpush1.msra.mxu0 0.0
      %533 = vmatprep.subr.mxu0 0.0
      %534 = vmatpush1.msra.mxu0 0.0
      %535 = vmatprep.subr.mxu0 0.0
      %536 = vmatpush1.msra.mxu0 0.0
      %537 = vmatprep.subr.mxu0 0.0
      %538 = vmatpush1.msra.mxu0 0.0
      %539 = vmatprep.subr.mxu0 %v494
      %540 = vmatpush1.msra.mxu0 %v493
      %541 = vmatprep.subr.mxu0 %v492
      %542 = vmatpush1.msra.mxu0 %v491
      %543 = vmatprep.subr.mxu0 0.0
      %544 = vmatpush2.msra.mxu0 0.0
      %545 = vmatprep.subr.mxu0 0.0
      %546 = vmatpush2.msra.mxu0 0.0
      %547 = vmatprep.subr.mxu0 0.0
      %548 = vmatpush2.msra.mxu0 0.0
      %549 = vmatprep.subr.mxu0 0.0
      %550 = vmatpush2.msra.mxu0 0.0
      %551 = vmatprep.subr.mxu0 0.0
      %552 = vmatpush2.msra.mxu0 0.0
      %553 = vmatprep.subr.mxu0 0.0
      %554 = vmatpush2.msra.mxu0 0.0
      %555 = vmatprep.subr.mxu0 0.0
      %556 = vmatpush2.msra.mxu0 0.0
      %557 = vmatprep.subr.mxu0 0.0
      %558 = vmatpush2.msra.mxu0 0.0
      %559 = vmatprep.subr.mxu0 0.0
      %560 = vmatpush2.msra.mxu0 0.0
      %561 = vmatprep.subr.mxu0 0.0
      %562 = vmatpush2.msra.mxu0 0.0
      %563 = vmatprep.subr.mxu0 0.0
      %564 = vmatpush2.msra.mxu0 0.0
      %565 = vmatprep.subr.mxu0 0.0
      %566 = vmatpush2.msra.mxu0 0.0
      %567 = vmatprep.subr.mxu0 0.0
      %568 = vmatpush2.msra.mxu0 0.0
      %569 = vmatprep.subr.mxu0 0.0
      %570 = vmatpush2.msra.mxu0 0.0
      %571 = vmatprep.subr.mxu0 0.0
      %572 = vmatpush2.msra.mxu0 0.0
      %573 = vmatprep.subr.mxu0 0.0
      %574 = vmatpush2.msra.mxu0 0.0
      %575 = vmatprep.mubr.f32.mxu0 0.0
      %576 = vmatmul.mubr.f32.gmra.mxu0 %v509
      %v577 = vpop.f32.mrf.mxu0
      %v578 = vadd.f32 %v500, %v577
      %v579 = vpop.f32.mrf.mxu0
      %v580 = vadd.f32 %v504, %v579
      %581 = vdwg.mxu0
      %v582 = vld [vmem:[%s5] sm:$0xff]
      %v583 = vld [vmem:[%s5 + $0x8] sm:$0xff]
      %v584 = vld [vmem:[%s5 + $0x10] sm:$0xff]
      %v585 = vld [vmem:[%s5 + $0x18] sm:$0xff]
      %v586 = vld [vmem:[%s5 + $0x20] sm:$0xff]
      %v587 = vld [vmem:[%s5 + $0x28] sm:$0xff]
      %v588 = vld [vmem:[%s5 + $0x30] sm:$0xff]
      %v589 = vld [vmem:[%s5 + $0x38] sm:$0xff]
      %v590 = vld [vmem:[%s5 + $0x40] sm:$0xff]
      %v591 = vld [vmem:[%s5 + $0x48] sm:$0xff]
      %v592 = vld [vmem:[%s5 + $0x50] sm:$0xff]
      %v593 = vld [vmem:[%s5 + $0x58] sm:$0xff]
      %v594 = vld [vmem:[%s5 + $0x60] sm:$0xff]
      %v595 = vld [vmem:[%s5 + $0x68] sm:$0xff]
      %v596 = vld [vmem:[%s5 + $0x70] sm:$0xff]
      %v597 = vld [vmem:[%s5 + $0x78] sm:$0xff]
      %v598 = vld [vmem:[%s5 + $0x80] sm:$0xff]
      %v599 = vld [vmem:[%s5 + $0x88] sm:$0xff]
      %v600 = vld [vmem:[%s5 + $0x90] sm:$0xff]
      %v601 = vld [vmem:[%s5 + $0x98] sm:$0xff]
      %v602 = vld [vmem:[%s5 + $0xa0] sm:$0xff]
      %v603 = vld [vmem:[%s5 + $0xa8] sm:$0xff]
      %v604 = vld [vmem:[%s5 + $0xb0] sm:$0xff]
      %v605 = vld [vmem:[%s5 + $0xb8] sm:$0xff]
      %v606 = vld [vmem:[%s5 + $0xc0] sm:$0xff]
      %v607 = vld [vmem:[%s5 + $0xc8] sm:$0xff]
      %v608 = vld [vmem:[%s5 + $0xd0] sm:$0xff]
      %v609 = vld [vmem:[%s5 + $0xd8] sm:$0xff]
      %v610 = vld [vmem:[%s5 + $0xe0] sm:$0xff]
      %v611 = vld [vmem:[%s5 + $0xe8] sm:$0xff]
      %v612 = vld [vmem:[%s5 + $0xf0] sm:$0xff]
      %v613 = vld [vmem:[%s5 + $0xf8] sm:$0xff]
      %v614 = vld [vmem:[%s5 + $0x100] sm:$0xff]
      %v615 = vld [vmem:[%s5 + $0x108] sm:$0xff]
      %v616 = vld [vmem:[%s5 + $0x110] sm:$0xff]
      %v617 = vld [vmem:[%s5 + $0x118] sm:$0xff]
      %v618 = vld [vmem:[%s5 + $0x120] sm:$0xff]
      %v619 = vld [vmem:[%s5 + $0x128] sm:$0xff]
      %v620 = vld [vmem:[%s5 + $0x130] sm:$0xff]
      %v621 = vld [vmem:[%s5 + $0x138] sm:$0xff]
      %v622 = vld [vmem:[%s5 + $0x140] sm:$0xff]
      %v623 = vld [vmem:[%s5 + $0x148] sm:$0xff]
      %v624 = vld [vmem:[%s5 + $0x150] sm:$0xff]
      %v625 = vld [vmem:[%s5 + $0x158] sm:$0xff]
      %v626 = vld [vmem:[%s5 + $0x160] sm:$0xff]
      %v627 = vld [vmem:[%s5 + $0x168] sm:$0xff]
      %v628 = vld [vmem:[%s5 + $0x170] sm:$0xff]
      %v629 = vld [vmem:[%s5 + $0x178] sm:$0xff]
      %v630 = vld [vmem:[%s5 + $0x180] sm:$0xff]
      %v631 = vld [vmem:[%s5 + $0x188] sm:$0xff]
      %v632 = vld [vmem:[%s5 + $0x190] sm:$0xff]
      %v633 = vld [vmem:[%s5 + $0x198] sm:$0xff]
      %v634 = vld [vmem:[%s5 + $0x1a0] sm:$0xff]
      %v635 = vld [vmem:[%s5 + $0x1a8] sm:$0xff]
      %v636 = vld [vmem:[%s5 + $0x1b0] sm:$0xff]
      %v637 = vld [vmem:[%s5 + $0x1b8] sm:$0xff]
      %v638 = vld [vmem:[%s5 + $0x1c0] sm:$0xff]
      %v639 = vld [vmem:[%s5 + $0x1c8] sm:$0xff]
      %v640 = vld [vmem:[%s5 + $0x1d0] sm:$0xff]
      %v641 = vld [vmem:[%s5 + $0x1d8] sm:$0xff]
      %v642 = vld [vmem:[%s5 + $0x1e0] sm:$0xff]
      %v643 = vld [vmem:[%s5 + $0x1e8] sm:$0xff]
      %v644 = vld [vmem:[%s5 + $0x1f0] sm:$0xff]
      %v645 = vld [vmem:[%s5 + $0x1f8] sm:$0xff]
      %646 = vmatprep.subr.mxu0 %v613
      %647 = vmatpush1.msra.mxu0 %v612
      %648 = vmatprep.subr.mxu0 %v611
      %649 = vmatpush1.msra.mxu0 %v610
      %650 = vmatprep.subr.mxu0 %v609
      %651 = vmatpush1.msra.mxu0 %v608
      %652 = vmatprep.subr.mxu0 %v607
      %653 = vmatpush1.msra.mxu0 %v606
      %654 = vmatprep.subr.mxu0 %v605
      %655 = vmatpush1.msra.mxu0 %v604
      %656 = vmatprep.subr.mxu0 %v603
      %657 = vmatpush1.msra.mxu0 %v602
      %658 = vmatprep.subr.mxu0 %v601
      %659 = vmatpush1.msra.mxu0 %v600
      %660 = vmatprep.subr.mxu0 %v599
      %661 = vmatpush1.msra.mxu0 %v598
      %662 = vmatprep.subr.mxu0 %v597
      %663 = vmatpush1.msra.mxu0 %v596
      %664 = vmatprep.subr.mxu0 %v595
      %665 = vmatpush1.msra.mxu0 %v594
      %666 = vmatprep.subr.mxu0 %v593
      %667 = vmatpush1.msra.mxu0 %v592
      %668 = vmatprep.subr.mxu0 %v591
      %669 = vmatpush1.msra.mxu0 %v590
      %670 = vmatprep.subr.mxu0 %v589
      %671 = vmatpush1.msra.mxu0 %v588
      %672 = vmatprep.subr.mxu0 %v587
      %673 = vmatpush1.msra.mxu0 %v586
      %674 = vmatprep.subr.mxu0 %v585
      %675 = vmatpush1.msra.mxu0 %v584
      %676 = vmatprep.subr.mxu0 %v583
      %677 = vmatpush1.msra.mxu0 %v582
      %678 = vmatprep.subr.mxu0 %v645
      %679 = vmatpush2.msra.mxu0 %v644
      %680 = vmatprep.subr.mxu0 %v643
      %681 = vmatpush2.msra.mxu0 %v642
      %682 = vmatprep.subr.mxu0 %v641
      %683 = vmatpush2.msra.mxu0 %v640
      %684 = vmatprep.subr.mxu0 %v639
      %685 = vmatpush2.msra.mxu0 %v638
      %686 = vmatprep.subr.mxu0 %v637
      %687 = vmatpush2.msra.mxu0 %v636
      %688 = vmatprep.subr.mxu0 %v635
      %689 = vmatpush2.msra.mxu0 %v634
      %690 = vmatprep.subr.mxu0 %v633
      %691 = vmatpush2.msra.mxu0 %v632
      %692 = vmatprep.subr.mxu0 %v631
      %693 = vmatpush2.msra.mxu0 %v630
      %694 = vmatprep.subr.mxu0 %v629
      %695 = vmatpush2.msra.mxu0 %v628
      %696 = vmatprep.subr.mxu0 %v627
      %697 = vmatpush2.msra.mxu0 %v626
      %698 = vmatprep.subr.mxu0 %v625
      %699 = vmatpush2.msra.mxu0 %v624
      %700 = vmatprep.subr.mxu0 %v623
      %701 = vmatpush2.msra.mxu0 %v622
      %702 = vmatprep.subr.mxu0 %v621
      %703 = vmatpush2.msra.mxu0 %v620
      %704 = vmatprep.subr.mxu0 %v619
      %705 = vmatpush2.msra.mxu0 %v618
      %706 = vmatprep.subr.mxu0 %v617
      %707 = vmatpush2.msra.mxu0 %v616
      %708 = vmatprep.subr.mxu0 %v615
      %709 = vmatpush2.msra.mxu0 %v614
      %710 = vmatprep.mubr.f32.mxu0 %v580
      %711 = vmatmul.mubr.f32.gmra.mxu0 %v578
      %v712 = vpop.f32.mrf.mxu0
      %v713 = vadd.f32 0.0, %v712
      %v714 = vpop.f32.mrf.mxu0
      %v715 = vadd.f32 0.0, %v714
      %716 = vdwg.mxu0
      %v717 = vxor.u32 %v713, 2147483648
      %v718 = vxor.u32 %v715, 2147483648
      %v719 = vmul.f32 %v717, 1.442695
      %v720 = vpow.pop %v719
      %v721 = vmul.f32 %v718, 1.442695
      %v722 = vpow.pop %v721
      %v723 = vadd.f32 %v720, 1.0
      %v724 = vadd.f32 %v722, 1.0
      %v725 = vrcp.pop %v723
      %v726 = vmul.f32 1.0, %v725
      %v727 = vrcp.pop %v724
      %v728 = vmul.f32 1.0, %v727
      %v731 = vcombine.low %v726, %v728
      %v733 = vunpack.c.l.s4 1983009808
      %v734 = vunpack.c.0.s8 %v733
      %v735 = vlaneseq
      %v736 = vshrl.u32 %v735, 7
      %v737 = vsub.s32 %v734, %v736
      %v738 = vrot.slane %v731, %v737
      %740 = vst [vmem:[#allocation6] sm:$0xf] %v738
      %v741 = vld [vmem:[%s6] sm:$0xff]
      %v742 = vld [vmem:[%s6 + $0x8] sm:$0xff]
      %v743 = vld [vmem:[%s6 + $0x10] sm:$0xff]
      %v744 = vld [vmem:[%s6 + $0x18] sm:$0xff]
      %v745 = vld [vmem:[%s6 + $0x20] sm:$0xff]
      %v746 = vld [vmem:[%s6 + $0x28] sm:$0xff]
      %v747 = vld [vmem:[%s6 + $0x30] sm:$0xff]
      %v748 = vld [vmem:[%s6 + $0x38] sm:$0xff]
      %v749 = vld [vmem:[%s6 + $0x40] sm:$0xff]
      %v750 = vld [vmem:[%s6 + $0x48] sm:$0xff]
      %v751 = vld [vmem:[%s6 + $0x50] sm:$0xff]
      %v752 = vld [vmem:[%s6 + $0x58] sm:$0xff]
      %v753 = vld [vmem:[%s6 + $0x60] sm:$0xff]
      %v754 = vld [vmem:[%s6 + $0x68] sm:$0xff]
      %v755 = vld [vmem:[%s6 + $0x70] sm:$0xff]
      %v756 = vld [vmem:[%s6 + $0x78] sm:$0xff]
      %v757 = vld [vmem:[%s6 + $0x80] sm:$0xff]
      %v758 = vld [vmem:[%s6 + $0x88] sm:$0xff]
      %v759 = vld [vmem:[%s6 + $0x90] sm:$0xff]
      %v760 = vld [vmem:[%s6 + $0x98] sm:$0xff]
      %v761 = vld [vmem:[%s6 + $0xa0] sm:$0xff]
      %v762 = vld [vmem:[%s6 + $0xa8] sm:$0xff]
      %v763 = vld [vmem:[%s6 + $0xb0] sm:$0xff]
      %v764 = vld [vmem:[%s6 + $0xb8] sm:$0xff]
      %v765 = vld [vmem:[%s6 + $0xc0] sm:$0xff]
      %v766 = vld [vmem:[%s6 + $0xc8] sm:$0xff]
      %v767 = vld [vmem:[%s6 + $0xd0] sm:$0xff]
      %v768 = vld [vmem:[%s6 + $0xd8] sm:$0xff]
      %v769 = vld [vmem:[%s6 + $0xe0] sm:$0xff]
      %v770 = vld [vmem:[%s6 + $0xe8] sm:$0xff]
      %v771 = vld [vmem:[%s6 + $0xf0] sm:$0xff]
      %v772 = vld [vmem:[%s6 + $0xf8] sm:$0xff]
      %v773 = vld [vmem:[%s7] sm:$0x1]
      %v775 = vlaneseq
      %v776 = vshrl.u32 %v775, 7
      %v777 = vsub.s32 0, %v776
      %v778 = vrot.slane %v773, %v777
      %780 = vmatprep.subr.mxu0 0.0
      %781 = vmatpush1.msra.mxu0 %v756
      %782 = vmatprep.subr.mxu0 0.0
      %783 = vmatpush1.msra.mxu0 %v755
      %784 = vmatprep.subr.mxu0 0.0
      %785 = vmatpush1.msra.mxu0 %v754
      %786 = vmatprep.subr.mxu0 0.0
      %787 = vmatpush1.msra.mxu0 %v753
      %788 = vmatprep.subr.mxu0 0.0
      %789 = vmatpush1.msra.mxu0 %v752
      %790 = vmatprep.subr.mxu0 0.0
      %791 = vmatpush1.msra.mxu0 %v751
      %792 = vmatprep.subr.mxu0 0.0
      %793 = vmatpush1.msra.mxu0 %v750
      %794 = vmatprep.subr.mxu0 0.0
      %795 = vmatpush1.msra.mxu0 %v749
      %796 = vmatprep.subr.mxu0 0.0
      %797 = vmatpush1.msra.mxu0 %v748
      %798 = vmatprep.subr.mxu0 0.0
      %799 = vmatpush1.msra.mxu0 %v747
      %800 = vmatprep.subr.mxu0 0.0
      %801 = vmatpush1.msra.mxu0 %v746
      %802 = vmatprep.subr.mxu0 0.0
      %803 = vmatpush1.msra.mxu0 %v745
      %804 = vmatprep.subr.mxu0 0.0
      %805 = vmatpush1.msra.mxu0 %v744
      %806 = vmatprep.subr.mxu0 0.0
      %807 = vmatpush1.msra.mxu0 %v743
      %808 = vmatprep.subr.mxu0 0.0
      %809 = vmatpush1.msra.mxu0 %v742
      %810 = vmatprep.subr.mxu0 0.0
      %811 = vmatpush1.msra.mxu0 %v741
      %812 = vmatprep.subr.mxu0 0.0
      %813 = vmatpush2.msra.mxu0 %v772
      %814 = vmatprep.subr.mxu0 0.0
      %815 = vmatpush2.msra.mxu0 %v771
      %816 = vmatprep.subr.mxu0 0.0
      %817 = vmatpush2.msra.mxu0 %v770
      %818 = vmatprep.subr.mxu0 0.0
      %819 = vmatpush2.msra.mxu0 %v769
      %820 = vmatprep.subr.mxu0 0.0
      %821 = vmatpush2.msra.mxu0 %v768
      %822 = vmatprep.subr.mxu0 0.0
      %823 = vmatpush2.msra.mxu0 %v767
      %824 = vmatprep.subr.mxu0 0.0
      %825 = vmatpush2.msra.mxu0 %v766
      %826 = vmatprep.subr.mxu0 0.0
      %827 = vmatpush2.msra.mxu0 %v765
      %828 = vmatprep.subr.mxu0 0.0
      %829 = vmatpush2.msra.mxu0 %v764
      %830 = vmatprep.subr.mxu0 0.0
      %831 = vmatpush2.msra.mxu0 %v763
      %832 = vmatprep.subr.mxu0 0.0
      %833 = vmatpush2.msra.mxu0 %v762
      %834 = vmatprep.subr.mxu0 0.0
      %835 = vmatpush2.msra.mxu0 %v761
      %836 = vmatprep.subr.mxu0 0.0
      %837 = vmatpush2.msra.mxu0 %v760
      %838 = vmatprep.subr.mxu0 0.0
      %839 = vmatpush2.msra.mxu0 %v759
      %840 = vmatprep.subr.mxu0 0.0
      %841 = vmatpush2.msra.mxu0 %v758
      %842 = vmatprep.subr.mxu0 0.0
      %843 = vmatpush2.msra.mxu0 %v757
      %844 = vmatprep.mubr.f32.mxu0 %v580
      %845 = vmatmul.mubr.f32.gmra.mxu0 %v578
      %v846 = vpop.f32.mrf.mxu0
      %v847 = vadd.f32 %v778, %v846
      %v848 = vpop.f32.mrf.mxu0
      %849 = vdwg.mxu0
      %vm850 = vcmask 9216
      %851 = vst.msk [vmem:[#allocation7] sm:$0x3] %vm850, %v847
    $region45: #{tpu_custom_call.1} parent=1 // pred_fallthru
      _
    // Predicated region
    $region46: #{tpu_custom_call.1} parent=1 // pred_check
      _
    $region47: #{tpu_custom_call.1} parent=1 // pred_check_branch
      %853 = sbr.rel (0) target = $region49
    $region48: #{tpu_custom_call.1} parent=1 // pred_region
      %s855 = ssub.s32 64, 64
      %856 = vsyncadd [#allocation5], %s855
      %s858 = sshll.u32 [#allocation6], 4
      %s859 = int_to_ptr.vmem [resolvable:$true] %s858
      %861 = dma.vmem_to_hbm [thread:$0]  %s859, 64, %s8, [#allocation5]
    $region49: #{tpu_custom_call.1} parent=1 // pred_fallthru
      _
    // Predicated region
    $region50: #{tpu_custom_call.1} parent=1 // pred_check
      _
    $region51: #{tpu_custom_call.1} parent=1 // pred_check_branch
      %863 = sbr.rel (0) target = $region53
    $region52: #{tpu_custom_call.1} parent=1 // pred_region
      %s865 = ssub.s32 32, 32
      %866 = vsyncadd [#allocation8], %s865
      %s868 = sshll.u32 [#allocation7], 4
      %s869 = int_to_ptr.vmem [resolvable:$true] %s868
      %871 = dma.vmem_to_hbm [thread:$0]  %s869, 32, %s9, [#allocation8]
    $region53: #{tpu_custom_call.1} parent=1 // pred_fallthru
      _
    // Predicated region
    $region54: #{tpu_custom_call.1} parent=1 // pred_check
      _
    $region55: #{tpu_custom_call.1} parent=1 // pred_check_branch
      %873 = sbr.rel (0) target = $region57
    $region56: #{tpu_custom_call.1} parent=1 // pred_region
      %874 = dma.done [#allocation5], 64
    $region57: #{tpu_custom_call.1} parent=1 // pred_fallthru
      _
    // Predicated region
    $region58: #{tpu_custom_call.1} parent=1 // pred_check
      _
    $region59: #{tpu_custom_call.1} parent=1 // pred_check_branch
      %876 = sbr.rel (0) target = $region61
    $region60: #{tpu_custom_call.1} parent=1 // pred_region
      %877 = dma.done [#allocation8], 32
    $region61: #{tpu_custom_call.1} parent=1 // pred_fallthru
      _
    %878 = vsyncpa [#allocation4], 1
    %879 = vsyncpa [#allocation5], 1
    %880 = vsyncpa [#allocation8], 1

</llo_original>
